<compile_context>
chip_gen: v7x
topology: tpu7x:2x2x1
jax: 0.10.0
libtpu: 0.0.40
codegen_flags: <defaults>
</compile_context>

<pallas_src>
import functools

import jax
import jax.numpy as jnp
from jax.experimental import pallas as pl
from jax.experimental.pallas import tpu as pltpu


OUT_PAD = 128  # lane-dense output width


def _round_up(x, m):
    return ((x + m - 1) // m) * m


def _wide_deep_kernel(wide_dim, xcat_ref, w1_ref, b1_ref, w2_ref, b2_ref, out_ref):
    """xcat = [X_wide | X_deep]  (TB, wide_dim + deep_dim)

    Matmul 1: [xw | xd] @ [[I, 0], [0, w1]] + [0 | b1]  -> [xw | h1]
              ReLU only on the deep columns (col >= wide_dim).
    Matmul 2: [xw | relu(h1)] @ [[ww, 0], [0, w2]] + [wb | b2]  (padded to 128)
              ReLU only on the deep columns (col >= 1; wide col 0 is NOT ReLU'd).
    Sigmoid, lane-dense store.
    """
    # ---- merged layer 1: deep Linear-1 + xw passthrough ----
    h = jnp.dot(xcat_ref[...], w1_ref[...], preferred_element_type=jnp.float32)
    h = h + b1_ref[...]
    col = jax.lax.broadcasted_iota(jnp.int32, h.shape, 1)
    h = jnp.where(col >= wide_dim, jnp.maximum(h, 0.0), h)  # ReLU deep cols only
    # TODO(synk): Dropout(0.5) applied as identity (eval mode); no RNG mask.

    # ---- merged layer 2: wide Linear (col 0) + deep Linear-2 (cols 1:) ----
    h = h.astype(w2_ref.dtype)  # feed narrow dtype back to the MXU when bf16
    z = jnp.dot(h, w2_ref[...], preferred_element_type=jnp.float32)
    z = z + b2_ref[...]
    col2 = jax.lax.broadcasted_iota(jnp.int32, z.shape, 1)
    z = jnp.where(col2 >= 1, jnp.maximum(z, 0.0), z)  # no ReLU on wide col 0

    out_ref[...] = jax.nn.sigmoid(z).astype(out_ref.dtype)


def wide_and_deep(xw, xd, params, *, block_rows=256, compute_dtype=jnp.float32):
    """Forward pass of WideAndDeepModel.

    block_rows: batch tile (multiple of 8). 256 fits comfortably everywhere;
    on v7x (64 MiB VMEM) larger tiles should be sized against the smaller
    budget, but activations here are tiny so 256 is safe on all generations.
    compute_dtype: jnp.float32 (exact) or jnp.bfloat16 (v6e/v7x fast path,
    f32 accumulation + f32 epilogue).
    """
    B, wide_dim = xw.shape
    deep_dim = xd.shape[1]
    hidden0 = params["w1"].shape[1]
    hidden1 = params["w2"].shape[1]
    out_dim = 1 + hidden1
    assert out_dim <= OUT_PAD

    k1 = wide_dim + deep_dim      # K of matmul 1
    n1 = wide_dim + hidden0       # N of matmul 1 / K of matmul 2

    # ---- build merged block weights/biases once (plain XLA, tiny) ----
    f32 = jnp.float32
    W1b = jnp.zeros((k1, n1), f32)
    W1b = W1b.at[:wide_dim, :wide_dim].set(jnp.eye(wide_dim, dtype=f32))
    W1b = W1b.at[wide_dim:, wide_dim:].set(params["w1"].astype(f32))
    b1b = jnp.concatenate(
        [jnp.zeros((1, wide_dim), f32), params["b1"].astype(f32)], axis=1)

    W2b = jnp.zeros((n1, OUT_PAD), f32)
    W2b = W2b.at[:wide_dim, 0:1].set(params["ww"].astype(f32))
    W2b = W2b.at[wide_dim:, 1:1 + hidden1].set(params["w2"].astype(f32))
    b2b = jnp.zeros((1, OUT_PAD), f32)
    b2b = b2b.at[:, 0:1].set(params["wb"].astype(f32))
    b2b = b2b.at[:, 1:1 + hidden1].set(params["b2"].astype(f32))

    # ---- operand dtype (MXU); biases / epilogue stay f32 ----
    op_dtype = jnp.dtype(compute_dtype)
    xcat = jnp.concatenate([xw, xd], axis=1).astype(op_dtype)
    W1b = W1b.astype(op_dtype)
    W2b = W2b.astype(op_dtype)

    # ---- batch tiling ----
    TB = _round_up(min(block_rows, _round_up(B, 8)), 8)
    B_pad = _round_up(B, TB)
    if B_pad != B:
        xcat = jnp.pad(xcat, ((0, B_pad - B), (0, 0)))
    grid = (B_pad // TB,)

    # ---- VMEM budget (resident weights + double-buffered activation tiles) ----
    isz = op_dtype.itemsize
    act_bytes = TB * k1 * isz + TB * OUT_PAD * 4
    weight_bytes = (k1 * n1 + n1 * OUT_PAD) * isz + (n1 + OUT_PAD) * 4
    vmem_bytes = int(4 * act_bytes + 2 * weight_bytes) + (4 << 20)
    vmem_bytes = min(vmem_bytes, 48 << 20)

    kernel = functools.partial(_wide_deep_kernel, wide_dim)

    out_padded = pl.pallas_call(
        kernel,
        out_shape=jax.ShapeDtypeStruct((B_pad, OUT_PAD), jnp.float32),
        grid=grid,
        in_specs=[
            pl.BlockSpec((TB, k1), lambda i: (i, 0)),        # activations (tiled)
            pl.BlockSpec((k1, n1), lambda i: (0, 0)),        # W1b (resident)
            pl.BlockSpec((1, n1), lambda i: (0, 0)),         # b1b (resident)
            pl.BlockSpec((n1, OUT_PAD), lambda i: (0, 0)),   # W2b (resident)
            pl.BlockSpec((1, OUT_PAD), lambda i: (0, 0)),    # b2b (resident)
        ],
        out_specs=pl.BlockSpec((TB, OUT_PAD), lambda i: (i, 0)),
        compiler_params=pltpu.CompilerParams(
            dimension_semantics=("parallel",),   # megacore sharding on v7x
            vmem_limit_bytes=vmem_bytes,
        ),
    )(xcat, W1b, b1b, W2b, b2b)

    return out_padded[:B, :out_dim]


def init_params(key, wide_dim, deep_dim, hidden_layers):
    """PyTorch-style Linear init: U(-1/sqrt(fan_in), 1/sqrt(fan_in)).
    Weights stored as (in_features, out_features)."""
    def linear(k, fan_in, fan_out):
        kw, kb = jax.random.split(k)
        bound = 1.0 / jnp.sqrt(fan_in)
        w = jax.random.uniform(kw, (fan_in, fan_out), jnp.float32, -bound, bound)
        b = jax.random.uniform(kb, (1, fan_out), jnp.float32, -bound, bound)
        return w, b

    k0, k1, k2 = jax.random.split(key, 3)
    ww, wb = linear(k0, wide_dim, 1)
    w1, b1 = linear(k1, deep_dim, hidden_layers[0])
    w2, b2 = linear(k2, hidden_layers[0], hidden_layers[1])
    return {"ww": ww, "wb": wb, "w1": w1, "b1": b1, "w2": w2, "b2": b2}


def reference(xw, xd, p):
    wide_out = xw @ p["ww"] + p["wb"]
    h = jnp.maximum(xd @ p["w1"] + p["b1"], 0.0)
    h = jnp.maximum(h @ p["w2"] + p["b2"], 0.0)
    return jax.nn.sigmoid(jnp.concatenate([wide_out, h], axis=1))


if __name__ == "__main__":
    batch = 8
    wide_dim = 16
    deep_dim = 32
    hidden_layers = [32, 16]

    key = jax.random.PRNGKey(0)
    kx, kd, kp = jax.random.split(key, 3)
    X_wide = jax.random.normal(kx, (batch, wide_dim), jnp.float32)
    X_deep = jax.random.normal(kd, (batch, deep_dim), jnp.float32)
    params = init_params(kp, wide_dim, deep_dim, hidden_layers)

    ref = reference(X_wide, X_deep, params)

    # f32 path (exact semantics of the PyTorch module)
    out = jax.block_until_ready(wide_and_deep(X_wide, X_deep, params))
    assert out.shape == (batch, 1 + hidden_layers[-1])
    assert jnp.allclose(out, ref, atol=1e-5, rtol=1e-5)

    # bf16 operand path (v6e/v7x fast path), f32 accumulation — looser tolerance
    out_bf16 = jax.block_until_ready(
        wide_and_deep(X_wide, X_deep, params, compute_dtype=jnp.bfloat16))
    assert out_bf16.shape == (batch, 1 + hidden_layers[-1])
    assert jnp.allclose(out_bf16, ref, atol=5e-2, rtol=5e-2)

    print("KERNEL_OK")
</pallas_src>

<mosaic_0001>
module attributes {stable_mosaic.version = 11 : i64} {
  func.func @_wide_deep_kernel(%arg0: i32, %arg1: memref<8x48xf32, #tpu.memory_space<vmem>>, %arg2: memref<48x48xf32, #tpu.memory_space<vmem>>, %arg3: memref<1x48xf32, #tpu.memory_space<vmem>>, %arg4: memref<48x128xf32, #tpu.memory_space<vmem>>, %arg5: memref<1x128xf32, #tpu.memory_space<vmem>>, %arg6: memref<8x128xf32, #tpu.memory_space<vmem>>) attributes {dimension_semantics = [#tpu.dimension_semantics<parallel>], iteration_bounds = array<i64: 1>, scalar_prefetch = 0 : i64, scratch_operands = 0 : i64, tpu.core_type = #tpu.core_type<tc>, window_params = [{transform_indices = @transform_0, window_bounds = array<i64: 8, 48>}, {pipeline_mode = #tpu.pipeline_mode<synchronous>, transform_indices = @transform_1, window_bounds = array<i64: 48, 48>}, {pipeline_mode = #tpu.pipeline_mode<synchronous>, transform_indices = @transform_2, window_bounds = array<i64: 1, 48>}, {pipeline_mode = #tpu.pipeline_mode<synchronous>, transform_indices = @transform_3, window_bounds = array<i64: 48, 128>}, {pipeline_mode = #tpu.pipeline_mode<synchronous>, transform_indices = @transform_4, window_bounds = array<i64: 1, 128>}, {transform_indices = @transform_5, window_bounds = array<i64: 8, 128>}]} {
    %c0 = arith.constant 0 : index
    %c0_0 = arith.constant 0 : index
    %0 = vector.load %arg1[%c0, %c0_0] : memref<8x48xf32, #tpu.memory_space<vmem>>, vector<8x48xf32>
    %c0_1 = arith.constant 0 : index
    %c0_2 = arith.constant 0 : index
    %1 = vector.load %arg2[%c0_1, %c0_2] : memref<48x48xf32, #tpu.memory_space<vmem>>, vector<48x48xf32>
    %cst = arith.constant dense<0.000000e+00> : vector<8x48xf32>
    %2 = tpu.matmul %0, %1, %cst {dimension_numbers = #tpu.dot_dimension_numbers<[1], [0], [0], [1], [0, 0, 1, 1], [], []>} : vector<8x48xf32>, vector<48x48xf32>, vector<8x48xf32> -> vector<8x48xf32>
    %c0_3 = arith.constant 0 : index
    %c0_4 = arith.constant 0 : index
    %3 = vector.load %arg3[%c0_3, %c0_4] : memref<1x48xf32, #tpu.memory_space<vmem>>, vector<1x48xf32>
    %4 = vector.broadcast %3 : vector<1x48xf32> to vector<8x48xf32>
    %5 = arith.addf %2, %4 : vector<8x48xf32>
    %6 = tpu.iota {dimensions = array<i32: 1>} : vector<8x48xi32>
    %c16_i32 = arith.constant 16 : i32
    %7 = vector.broadcast %c16_i32 : i32 to vector<8x48xi32>
    %8 = arith.cmpi sge, %6, %7 : vector<8x48xi32>
    %cst_5 = arith.constant 0.000000e+00 : f32
    %9 = vector.broadcast %cst_5 : f32 to vector<8x48xf32>
    %10 = arith.maximumf %5, %9 : vector<8x48xf32>
    %11 = arith.select %8, %10, %5 : vector<8x48xi1>, vector<8x48xf32>
    %c0_6 = arith.constant 0 : index
    %c0_7 = arith.constant 0 : index
    %12 = vector.load %arg4[%c0_6, %c0_7] : memref<48x128xf32, #tpu.memory_space<vmem>>, vector<48x128xf32>
    %cst_8 = arith.constant dense<0.000000e+00> : vector<8x128xf32>
    %13 = tpu.matmul %11, %12, %cst_8 {dimension_numbers = #tpu.dot_dimension_numbers<[1], [0], [0], [1], [0, 0, 1, 1], [], []>} : vector<8x48xf32>, vector<48x128xf32>, vector<8x128xf32> -> vector<8x128xf32>
    %c0_9 = arith.constant 0 : index
    %c0_10 = arith.constant 0 : index
    %14 = vector.load %arg5[%c0_9, %c0_10] : memref<1x128xf32, #tpu.memory_space<vmem>>, vector<1x128xf32>
    %15 = vector.broadcast %14 : vector<1x128xf32> to vector<8x128xf32>
    %16 = arith.addf %13, %15 : vector<8x128xf32>
    %17 = tpu.iota {dimensions = array<i32: 1>} : vector<8x128xi32>
    %c1_i32 = arith.constant 1 : i32
    %18 = vector.broadcast %c1_i32 : i32 to vector<8x128xi32>
    %19 = arith.cmpi sge, %17, %18 : vector<8x128xi32>
    %cst_11 = arith.constant 0.000000e+00 : f32
    %20 = vector.broadcast %cst_11 : f32 to vector<8x128xf32>
    %21 = arith.maximumf %16, %20 : vector<8x128xf32>
    %22 = arith.select %19, %21, %16 : vector<8x128xi1>, vector<8x128xf32>
    %23 = arith.negf %22 : vector<8x128xf32>
    %24 = math.exp %23 : vector<8x128xf32>
    %cst_12 = arith.constant 1.000000e+00 : f32
    %25 = vector.broadcast %cst_12 : f32 to vector<8x128xf32>
    %26 = arith.addf %25, %24 : vector<8x128xf32>
    %27 = arith.divf %25, %26 : vector<8x128xf32>
    %c0_13 = arith.constant 0 : index
    %c0_14 = arith.constant 0 : index
    %28 = vector.load %arg6[%c0_13, %c0_14] : memref<8x128xf32, #tpu.memory_space<vmem>>, vector<8x128xf32>
    tpu.vector_store %arg6[%c0_13, %c0_14], %27 {strides = array<i32>} : memref<8x128xf32, #tpu.memory_space<vmem>>, vector<8x128xf32>,
    return
  }
  func.func @transform_0(%arg0: i32) -> (i32, i32) {
    %c0_i32 = arith.constant 0 : i32
    %c0_i32_0 = arith.constant 0 : i32
    return %arg0, %c0_i32 : i32, i32
  }
  func.func @transform_1(%arg0: i32) -> (i32, i32) {
    %c0_i32 = arith.constant 0 : i32
    %c0_i32_0 = arith.constant 0 : i32
    %c0_i32_1 = arith.constant 0 : i32
    return %c0_i32, %c0_i32_0 : i32, i32
  }
  func.func @transform_2(%arg0: i32) -> (i32, i32) {
    %c0_i32 = arith.constant 0 : i32
    %c0_i32_0 = arith.constant 0 : i32
    %c0_i32_1 = arith.constant 0 : i32
    return %c0_i32, %c0_i32_0 : i32, i32
  }
  func.func @transform_3(%arg0: i32) -> (i32, i32) {
    %c0_i32 = arith.constant 0 : i32
    %c0_i32_0 = arith.constant 0 : i32
    %c0_i32_1 = arith.constant 0 : i32
    return %c0_i32, %c0_i32_0 : i32, i32
  }
  func.func @transform_4(%arg0: i32) -> (i32, i32) {
    %c0_i32 = arith.constant 0 : i32
    %c0_i32_0 = arith.constant 0 : i32
    %c0_i32_1 = arith.constant 0 : i32
    return %c0_i32, %c0_i32_0 : i32, i32
  }
  func.func @transform_5(%arg0: i32) -> (i32, i32) {
    %c0_i32 = arith.constant 0 : i32
    %c0_i32_0 = arith.constant 0 : i32
    return %arg0, %c0_i32 : i32, i32
  }
}

</mosaic_0001>

<llo_original>
// kernel: tpu_custom_call.1
$region0: #{tpu_custom_call.1}
  #allocation0 [shape = 'u32[]', space=smem, size = 0x4, offset = 0x4, fixed_abs, tag = 'smem constant byte address 0x4 - core index']
  #allocation1 [shape = 'u32[144,128]{1,0:T(1,128)}', space=vmem, size = 0x12000, scoped, tag = 'internal scratch']
  %s0 = inlined_call_operand.hbm [shape: f32[8,48], index: 0, kind: input, shape index: {}]
  %s1 = inlined_call_operand.hbm [shape: f32[48,48], index: 1, kind: input, shape index: {}]
  %s2 = inlined_call_operand.vmem [shape: f32[1,48], index: 2, kind: input, shape index: {}]
  %s3 = inlined_call_operand.hbm [shape: f32[48,128], index: 3, kind: input, shape index: {}]
  %s4 = inlined_call_operand.vmem [shape: f32[1,128], index: 4, kind: input, shape index: {}]
  %s5 = inlined_call_operand.hbm [shape: f32[8,128], index: 5, kind: output, shape index: {}]
  %s6 = sld [smem:[#allocation0]]
  $region42: #{tpu_custom_call.1} parent=0
    _
  %s8 = ssub.s32 1, %s6
  %s9 = scalar_select 0, %s8, %s6
  $region1: #{tpu_custom_call.1} parent=0
    #allocation2 [shape = 'u8[4096]{0}', space=vmem, size = 0x1000, scoped, tag = 'input window, operand 0, single buffered']
    #allocation3 [shape = 's32[1]{0}', space=sflag, size = 0x4, scoped, tag = 'scoped memory for tpu_custom_call.1']
    #allocation4 [shape = 's32[1]{0}', space=sflag, size = 0x4, scoped, tag = 'scoped memory for tpu_custom_call.1']
    #allocation5 [shape = 'u8[24576]{0}', space=vmem, size = 0x6000, scoped, tag = 'input window, operand 1, single buffered']
    #allocation6 [shape = 's32[1]{0}', space=sflag, size = 0x4, scoped, tag = 'scoped memory for tpu_custom_call.1']
    #allocation7 [shape = 'u8[24576]{0}', space=vmem, size = 0x6000, scoped, tag = 'input window, operand 3, single buffered']
    #allocation8 [shape = 'u8[4096]{0}', space=vmem, size = 0x1000, scoped, tag = 'output window, operand 0, single buffered']
    %10 = vsyncpa [#allocation3], 0
    %11 = vsyncpa [#allocation6], 0
    %12 = vsyncpa [#allocation4], 0
    // Predicated region
    $region2: #{tpu_custom_call.1} parent=1 // pred_check
      _
    $region3: #{tpu_custom_call.1} parent=1 // pred_check_branch
      %14 = sbr.rel (0) target = $region5
    $region4: #{tpu_custom_call.1} parent=1 // pred_region
      %s16 = ssub.s32 128, 128
      %17 = vsyncadd [#allocation3], %s16
      %s19 = sshll.u32 [#allocation2], 4
      %s20 = int_to_ptr.vmem [resolvable:$true] %s19
      %22 = dma.hbm_to_vmem [thread:$0]  %s0, 128, %s20, [#allocation3]
    $region5: #{tpu_custom_call.1} parent=1 // pred_fallthru
      _
    // Predicated region
    $region6: #{tpu_custom_call.1} parent=1 // pred_check
      _
    $region7: #{tpu_custom_call.1} parent=1 // pred_check_branch
      %24 = sbr.rel (0) target = $region9
    $region8: #{tpu_custom_call.1} parent=1 // pred_region
      %s26 = ssub.s32 768, 768
      %27 = vsyncadd [#allocation6], %s26
      %s28 = sshll.u32 [#allocation5], 4
      %s29 = int_to_ptr.vmem [resolvable:$true] %s28
      %34 = dma.hbm_to_vmem [thread:$0]  %s1, 768, %s29, [#allocation6], 128, 128, 8
    $region9: #{tpu_custom_call.1} parent=1 // pred_fallthru
      _
    // Predicated region
    $region10: #{tpu_custom_call.1} parent=1 // pred_check
      _
    $region11: #{tpu_custom_call.1} parent=1 // pred_check_branch
      %36 = sbr.rel (0) target = $region13
    $region12: #{tpu_custom_call.1} parent=1 // pred_region
      _
    $region13: #{tpu_custom_call.1} parent=1 // pred_fallthru
      _
    // Predicated region
    $region14: #{tpu_custom_call.1} parent=1 // pred_check
      _
    $region15: #{tpu_custom_call.1} parent=1 // pred_check_branch
      %38 = sbr.rel (0) target = $region17
    $region16: #{tpu_custom_call.1} parent=1 // pred_region
      %s40 = ssub.s32 768, 768
      %41 = vsyncadd [#allocation6], %s40
      %s42 = sshll.u32 [#allocation7], 4
      %s43 = int_to_ptr.vmem [resolvable:$true] %s42
      %48 = dma.hbm_to_vmem [thread:$0]  %s3, 768, %s43, [#allocation6], 128, 128, 8
    $region17: #{tpu_custom_call.1} parent=1 // pred_fallthru
      _
    // Predicated region
    $region18: #{tpu_custom_call.1} parent=1 // pred_check
      _
    $region19: #{tpu_custom_call.1} parent=1 // pred_check_branch
      %50 = sbr.rel (0) target = $region21
    $region20: #{tpu_custom_call.1} parent=1 // pred_region
      _
    $region21: #{tpu_custom_call.1} parent=1 // pred_fallthru
      _
    // Predicated region
    $region22: #{tpu_custom_call.1} parent=1 // pred_check
      _
    $region23: #{tpu_custom_call.1} parent=1 // pred_check_branch
      %52 = sbr.rel (0) target = $region25
    $region24: #{tpu_custom_call.1} parent=1 // pred_region
      %53 = dma.done [#allocation3], 128
    $region25: #{tpu_custom_call.1} parent=1 // pred_fallthru
      _
    // Predicated region
    $region26: #{tpu_custom_call.1} parent=1 // pred_check
      _
    $region27: #{tpu_custom_call.1} parent=1 // pred_check_branch
      %55 = sbr.rel (0) target = $region29
    $region28: #{tpu_custom_call.1} parent=1 // pred_region
      %56 = dma.done [#allocation6], 768
    $region29: #{tpu_custom_call.1} parent=1 // pred_fallthru
      _
    // Predicated region
    $region30: #{tpu_custom_call.1} parent=1 // pred_check
      _
    $region31: #{tpu_custom_call.1} parent=1 // pred_check_branch
      %58 = sbr.rel (0) target = $region33
    $region32: #{tpu_custom_call.1} parent=1 // pred_region
      %59 = dma.done [#allocation6], 768
    $region33: #{tpu_custom_call.1} parent=1 // pred_fallthru
      _
    %v60 = vld [vmem:[#allocation2] sm:$0xff]
    %v61 = vld [vmem:[#allocation5] sm:$0xff]
    %v62 = vld [vmem:[#allocation5 + $0x8] sm:$0xff]
    %v63 = vld [vmem:[#allocation5 + $0x10] sm:$0xff]
    %v64 = vld [vmem:[#allocation5 + $0x18] sm:$0xff]
    %v65 = vld [vmem:[#allocation5 + $0x20] sm:$0xff]
    %v66 = vld [vmem:[#allocation5 + $0x28] sm:$0xff]
    %v67 = vld [vmem:[%s2] sm:$0x1]
    %v69 = vlaneseq
    %v70 = vshrl.u32 %v69, 7
    %v71 = vsub.s32 0, %v70
    %v72 = vrot.slane %v67, %v71
    %vm74 = vcmask 392192
    %v76 = vsel %vm74, %v60, 0
    %78 = vmatprep.subr.mxu0 0.0
    %79 = vmatpush1.msra.mxu0 %v61
    %80 = vmatprep.subr.mxu0 0.0
    %81 = vmatpush1.msra.mxu0 %v62
    %82 = vmatprep.subr.mxu0 0.0
    %83 = vmatpush1.msra.mxu0 %v63
    %84 = vmatprep.subr.mxu0 0.0
    %85 = vmatpush1.msra.mxu0 %v64
    %86 = vmatprep.subr.mxu0 0.0
    %87 = vmatpush1.msra.mxu0 %v65
    %88 = vmatprep.subr.mxu0 0.0
    %89 = vmatpush1.msra.mxu0 %v66
    %90 = vmatprep.subr.mxu0 0.0
    %91 = vmatpush1.msra.mxu0 0.0
    %92 = vmatprep.subr.mxu0 0.0
    %93 = vmatpush1.msra.mxu0 0.0
    %94 = vmatprep.subr.mxu0 0.0
    %95 = vmatpush1.msra.mxu0 0.0
    %96 = vmatprep.subr.mxu0 0.0
    %97 = vmatpush1.msra.mxu0 0.0
    %98 = vmatprep.subr.mxu0 0.0
    %99 = vmatpush1.msra.mxu0 0.0
    %100 = vmatprep.subr.mxu0 0.0
    %101 = vmatpush1.msra.mxu0 0.0
    %102 = vmatprep.subr.mxu0 0.0
    %103 = vmatpush1.msra.mxu0 0.0
    %104 = vmatprep.subr.mxu0 0.0
    %105 = vmatpush1.msra.mxu0 0.0
    %106 = vmatprep.subr.mxu0 0.0
    %107 = vmatpush1.msra.mxu0 0.0
    %108 = vmatprep.subr.mxu0 0.0
    %109 = vmatpush1.msra.mxu0 0.0
    %110 = vmatprep.subr.mxu0 0.0
    %111 = vmatpush1.msra.mxu0 0.0
    %112 = vmatprep.subr.mxu0 0.0
    %113 = vmatpush1.msra.mxu0 0.0
    %114 = vmatprep.subr.mxu0 0.0
    %115 = vmatpush1.msra.mxu0 0.0
    %116 = vmatprep.subr.mxu0 0.0
    %117 = vmatpush1.msra.mxu0 0.0
    %118 = vmatprep.subr.mxu0 0.0
    %119 = vmatpush1.msra.mxu0 0.0
    %120 = vmatprep.subr.mxu0 0.0
    %121 = vmatpush1.msra.mxu0 0.0
    %122 = vmatprep.subr.mxu0 0.0
    %123 = vmatpush1.msra.mxu0 0.0
    %124 = vmatprep.subr.mxu0 0.0
    %125 = vmatpush1.msra.mxu0 0.0
    %126 = vmatprep.subr.mxu0 0.0
    %127 = vmatpush1.msra.mxu0 0.0
    %128 = vmatprep.subr.mxu0 0.0
    %129 = vmatpush1.msra.mxu0 0.0
    %130 = vmatprep.subr.mxu0 0.0
    %131 = vmatpush1.msra.mxu0 0.0
    %132 = vmatprep.subr.mxu0 0.0
    %133 = vmatpush1.msra.mxu0 0.0
    %134 = vmatprep.subr.mxu0 0.0
    %135 = vmatpush1.msra.mxu0 0.0
    %136 = vmatprep.subr.mxu0 0.0
    %137 = vmatpush1.msra.mxu0 0.0
    %138 = vmatprep.subr.mxu0 0.0
    %139 = vmatpush1.msra.mxu0 0.0
    %140 = vmatprep.subr.mxu0 0.0
    %141 = vmatpush1.msra.mxu0 0.0
    %142 = vmatprep.mubr.f32.mxu0 0.0
    %143 = vmatmul.mubr.f32.gmra.mrb[0].mxu0 %v76
    %v144 = vpop.f32.mrb[0].mxu0
    %v145 = vadd.f32 %v72, %v144
    %v146 = vpop.f32.mrb[0].mxu0
    %147 = vdwg.mxu0
    %v148 = vlaneseq
    %v149 = vand.u32 %v148, 127
    %vm150 = vcmp.ge.s32.totalorder %v149, 16
    %v151 = vmax.f32 %v145, 0.0
    %v152 = vsel %vm150, %v151, %v145
    %v153 = vld [vmem:[#allocation7] sm:$0xff]
    %v154 = vld [vmem:[#allocation7 + $0x8] sm:$0xff]
    %v155 = vld [vmem:[#allocation7 + $0x10] sm:$0xff]
    %v156 = vld [vmem:[#allocation7 + $0x18] sm:$0xff]
    %v157 = vld [vmem:[#allocation7 + $0x20] sm:$0xff]
    %v158 = vld [vmem:[#allocation7 + $0x28] sm:$0xff]
    %v159 = vld [vmem:[%s4] sm:$0x1]
    %v161 = vlaneseq
    %v162 = vshrl.u32 %v161, 7
    %v163 = vsub.s32 0, %v162
    %v164 = vrot.slane %v159, %v163
    %v167 = vsel %vm74, %v152, 0
    %169 = vmatprep.subr.mxu0 0.0
    %170 = vmatpush1.msra.mxu0 %v153
    %171 = vmatprep.subr.mxu0 0.0
    %172 = vmatpush1.msra.mxu0 %v154
    %173 = vmatprep.subr.mxu0 0.0
    %174 = vmatpush1.msra.mxu0 %v155
    %175 = vmatprep.subr.mxu0 0.0
    %176 = vmatpush1.msra.mxu0 %v156
    %177 = vmatprep.subr.mxu0 0.0
    %178 = vmatpush1.msra.mxu0 %v157
    %179 = vmatprep.subr.mxu0 0.0
    %180 = vmatpush1.msra.mxu0 %v158
    %181 = vmatprep.subr.mxu0 0.0
    %182 = vmatpush1.msra.mxu0 0.0
    %183 = vmatprep.subr.mxu0 0.0
    %184 = vmatpush1.msra.mxu0 0.0
    %185 = vmatprep.subr.mxu0 0.0
    %186 = vmatpush1.msra.mxu0 0.0
    %187 = vmatprep.subr.mxu0 0.0
    %188 = vmatpush1.msra.mxu0 0.0
    %189 = vmatprep.subr.mxu0 0.0
    %190 = vmatpush1.msra.mxu0 0.0
    %191 = vmatprep.subr.mxu0 0.0
    %192 = vmatpush1.msra.mxu0 0.0
    %193 = vmatprep.subr.mxu0 0.0
    %194 = vmatpush1.msra.mxu0 0.0
    %195 = vmatprep.subr.mxu0 0.0
    %196 = vmatpush1.msra.mxu0 0.0
    %197 = vmatprep.subr.mxu0 0.0
    %198 = vmatpush1.msra.mxu0 0.0
    %199 = vmatprep.subr.mxu0 0.0
    %200 = vmatpush1.msra.mxu0 0.0
    %201 = vmatprep.subr.mxu0 0.0
    %202 = vmatpush1.msra.mxu0 0.0
    %203 = vmatprep.subr.mxu0 0.0
    %204 = vmatpush1.msra.mxu0 0.0
    %205 = vmatprep.subr.mxu0 0.0
    %206 = vmatpush1.msra.mxu0 0.0
    %207 = vmatprep.subr.mxu0 0.0
    %208 = vmatpush1.msra.mxu0 0.0
    %209 = vmatprep.subr.mxu0 0.0
    %210 = vmatpush1.msra.mxu0 0.0
    %211 = vmatprep.subr.mxu0 0.0
    %212 = vmatpush1.msra.mxu0 0.0
    %213 = vmatprep.subr.mxu0 0.0
    %214 = vmatpush1.msra.mxu0 0.0
    %215 = vmatprep.subr.mxu0 0.0
    %216 = vmatpush1.msra.mxu0 0.0
    %217 = vmatprep.subr.mxu0 0.0
    %218 = vmatpush1.msra.mxu0 0.0
    %219 = vmatprep.subr.mxu0 0.0
    %220 = vmatpush1.msra.mxu0 0.0
    %221 = vmatprep.subr.mxu0 0.0
    %222 = vmatpush1.msra.mxu0 0.0
    %223 = vmatprep.subr.mxu0 0.0
    %224 = vmatpush1.msra.mxu0 0.0
    %225 = vmatprep.subr.mxu0 0.0
    %226 = vmatpush1.msra.mxu0 0.0
    %227 = vmatprep.subr.mxu0 0.0
    %228 = vmatpush1.msra.mxu0 0.0
    %229 = vmatprep.subr.mxu0 0.0
    %230 = vmatpush1.msra.mxu0 0.0
    %231 = vmatprep.subr.mxu0 0.0
    %232 = vmatpush1.msra.mxu0 0.0
    %233 = vmatprep.mubr.f32.mxu0 0.0
    %234 = vmatmul.mubr.f32.gmra.mrb[0].mxu0 %v167
    %v235 = vpop.f32.mrb[0].mxu0
    %v236 = vadd.f32 %v164, %v235
    %v237 = vpop.f32.mrb[0].mxu0
    %238 = vdwg.mxu0
    %vm239 = vcmp.ge.s32.totalorder %v149, 1
    %v240 = vmax.f32 %v236, 0.0
    %v241 = vsel %vm239, %v240, %v236
    %v242 = vxor.u32 %v241, 2147483648
    %v243 = vmul.f32 %v242, 1.442695
    %v244 = vpow.pop %v243
    %v245 = vadd.f32 %v244, 1.0
    %v246 = vrcp.pop %v245
    %v247 = vmul.f32 1.0, %v246
    %248 = vst [vmem:[#allocation8] sm:$0xff] %v247
    // Predicated region
    $region34: #{tpu_custom_call.1} parent=1 // pred_check
      _
    $region35: #{tpu_custom_call.1} parent=1 // pred_check_branch
      %250 = sbr.rel (0) target = $region37
    $region36: #{tpu_custom_call.1} parent=1 // pred_region
      %s252 = ssub.s32 128, 128
      %253 = vsyncadd [#allocation4], %s252
      %s255 = sshll.u32 [#allocation8], 4
      %s256 = int_to_ptr.vmem [resolvable:$true] %s255
      %258 = dma.vmem_to_hbm [thread:$0]  %s256, 128, %s5, [#allocation4]
    $region37: #{tpu_custom_call.1} parent=1 // pred_fallthru
      _
    // Predicated region
    $region38: #{tpu_custom_call.1} parent=1 // pred_check
      _
    $region39: #{tpu_custom_call.1} parent=1 // pred_check_branch
      %260 = sbr.rel (0) target = $region41
    $region40: #{tpu_custom_call.1} parent=1 // pred_region
      %261 = dma.done [#allocation4], 128
    $region41: #{tpu_custom_call.1} parent=1 // pred_fallthru
      _
    %262 = vsyncpa [#allocation3], 1
    %263 = vsyncpa [#allocation6], 1
    %264 = vsyncpa [#allocation4], 1

</llo_original>
